<compile_context>
chip_gen: v6e
topology: v6e:2x2x1
jax: 0.10.0
libtpu: 0.0.40
codegen_flags: <defaults>
</compile_context>

<pallas_src>
import functools

import jax
import jax.numpy as jnp
from jax.experimental import pallas as pl
from jax.experimental.pallas import tpu as pltpu


def _linear_kernel(x_ref, w_ref, b_ref, o_ref):
    # x_ref: (TB, F)  w_ref: (F, TC)  b_ref: (1, TC)  o_ref: (TB, TC)
    acc = jnp.dot(x_ref[...], w_ref[...], preferred_element_type=jnp.float32)
    o_ref[...] = (acc + b_ref[...]).astype(o_ref.dtype)


def prepare_params(weight, bias):
    """One-time parameter prep (do this at load time, NOT per forward call).

    weight: [C, F] (torch nn.Linear layout)  ->  [F, C]
    bias:   [C]                              ->  [1, C]
    """
    w_t = jnp.asarray(weight).T          # [F, C], canonical MXU RHS layout
    b_row = jnp.asarray(bias).reshape(1, -1)
    return w_t, b_row


@functools.partial(jax.jit, static_argnames=("block_b",))
def predictor_forward(features, w_t, b_row, *, block_b=2048):
    """features: [B, F] f32; w_t: [F, C] f32; b_row: [1, C] f32."""
    B, F = features.shape
    F_w, C = w_t.shape
    assert F == F_w and b_row.shape == (1, C)

    itemsize = jnp.dtype(features.dtype).itemsize

    # --- N (cate_num) tiling only when C is large and 128-aligned; otherwise
    #     the block covers the full C dim (satisfies the (8,128) rule). ------
    if C % 128 == 0 and C >= 512:
        TC = 256
    else:
        TC = C
    nc = pl.cdiv(C, TC)

    # --- batch tile size.  Budget ~12 MiB working set (safe under v5e's
    #     16 MiB scoped default and v7x's 64 MiB physical), counting the 2x
    #     double-buffering Pallas applies to EVERY input BlockSpec, weight
    #     and bias included. ------------------------------------------------
    vmem_budget = 12 * 1024 * 1024
    param_bytes = 2 * (F * TC + TC) * itemsize          # double-buffered W/b blocks
    bytes_per_row = 2 * (F + TC) * itemsize             # double-buffered x + out tiles
    max_tb = max(8, (vmem_budget - param_bytes) // max(bytes_per_row, 1))
    TB = int(min(block_b, B, max_tb))
    # v7x megacore: ensure >= 2 batch tiles when the batch allows it, so both
    # TensorCores get work on the "parallel" axis.
    if TB >= B and B >= 16:
        TB = max(8, (pl.cdiv(B, 2) // 8) * 8)
    if TB < B:
        TB = max(8, (TB // 8) * 8)                      # sublane-aligned tiles
    nb = pl.cdiv(B, TB)
    # Partial last batch tile (B % TB != 0) computes on stale VMEM rows; the
    # writeback is clipped to B rows so this is benign — do not "fix".

    out = pl.pallas_call(
        _linear_kernel,
        out_shape=jax.ShapeDtypeStruct((B, C), features.dtype),
        grid=(nb, nc),
        in_specs=[
            pl.BlockSpec((TB, F), lambda i, j: (i, 0)),   # activations: tiled over B
            pl.BlockSpec((F, TC), lambda i, j: (0, j)),   # weight: tiled over C (or resident)
            pl.BlockSpec((1, TC), lambda i, j: (0, j)),   # bias row
        ],
        out_specs=pl.BlockSpec((TB, TC), lambda i, j: (i, j)),
        compiler_params=pltpu.CompilerParams(
            dimension_semantics=("parallel", "parallel"),  # megacore-shardable axes
            vmem_limit_bytes=32 * 1024 * 1024,             # explicit, <= physical on all gens
        ),
    )(features, w_t, b_row)

    return out


if __name__ == "__main__":
    # Small shapes consistent with the module: batch=8, feature_len=32, cate_num=16.
    B, feature_len, cate_num = 8, 32, 16

    key = jax.random.PRNGKey(0)
    k_x, k_w = jax.random.split(key)

    features = jax.random.normal(k_x, (B, feature_len), dtype=jnp.float32)

    # Deterministic parameter init mirroring the module's __init__:
    #   weight ~ N(0, 0.01), bias = 0.0   (torch layout: [cate_num, feature_len])
    weight = 0.01 * jax.random.normal(k_w, (cate_num, feature_len), dtype=jnp.float32)
    bias = jnp.zeros((cate_num,), dtype=jnp.float32)

    # One-time parameter prep (off the hot path).
    w_t, b_row = prepare_params(weight, bias)

    out = predictor_forward(features, w_t, b_row)
    out = jax.block_until_ready(out)

    # Reference check against plain JAX.
    ref = features @ weight.T + bias
    assert out.shape == (B, cate_num)
    assert jnp.allclose(out, ref, atol=1e-5, rtol=1e-5)

    print("KERNEL_OK")
</pallas_src>

<mosaic_0001>
module attributes {stable_mosaic.version = 11 : i64} {
  func.func @_linear_kernel(%arg0: i32, %arg1: i32, %arg2: memref<8x32xf32, #tpu.memory_space<vmem>>, %arg3: memref<32x16xf32, #tpu.memory_space<vmem>>, %arg4: memref<1x16xf32, #tpu.memory_space<vmem>>, %arg5: memref<8x16xf32, #tpu.memory_space<vmem>>) attributes {dimension_semantics = [#tpu.dimension_semantics<parallel>, #tpu.dimension_semantics<parallel>], iteration_bounds = array<i64: 1, 1>, scalar_prefetch = 0 : i64, scratch_operands = 0 : i64, tpu.core_type = #tpu.core_type<tc>, window_params = [{transform_indices = @transform_0, window_bounds = array<i64: 8, 32>}, {transform_indices = @transform_1, window_bounds = array<i64: 32, 16>}, {transform_indices = @transform_2, window_bounds = array<i64: 1, 16>}, {transform_indices = @transform_3, window_bounds = array<i64: 8, 16>}]} {
    %c0 = arith.constant 0 : index
    %c0_0 = arith.constant 0 : index
    %0 = vector.load %arg2[%c0, %c0_0] : memref<8x32xf32, #tpu.memory_space<vmem>>, vector<8x32xf32>
    %c0_1 = arith.constant 0 : index
    %c0_2 = arith.constant 0 : index
    %1 = vector.load %arg3[%c0_1, %c0_2] : memref<32x16xf32, #tpu.memory_space<vmem>>, vector<32x16xf32>
    %cst = arith.constant dense<0.000000e+00> : vector<8x16xf32>
    %2 = tpu.matmul %0, %1, %cst {dimension_numbers = #tpu.dot_dimension_numbers<[1], [0], [0], [1], [0, 0, 1, 1], [], []>} : vector<8x32xf32>, vector<32x16xf32>, vector<8x16xf32> -> vector<8x16xf32>
    %c0_3 = arith.constant 0 : index
    %c0_4 = arith.constant 0 : index
    %3 = vector.load %arg4[%c0_3, %c0_4] : memref<1x16xf32, #tpu.memory_space<vmem>>, vector<1x16xf32>
    %4 = vector.broadcast %3 : vector<1x16xf32> to vector<8x16xf32>
    %5 = arith.addf %2, %4 : vector<8x16xf32>
    %c0_5 = arith.constant 0 : index
    %c0_6 = arith.constant 0 : index
    %6 = vector.load %arg5[%c0_5, %c0_6] : memref<8x16xf32, #tpu.memory_space<vmem>>, vector<8x16xf32>
    tpu.vector_store %arg5[%c0_5, %c0_6], %5 {strides = array<i32>} : memref<8x16xf32, #tpu.memory_space<vmem>>, vector<8x16xf32>,
    return
  }
  func.func @transform_0(%arg0: i32, %arg1: i32) -> (i32, i32) {
    %c0_i32 = arith.constant 0 : i32
    %c0_i32_0 = arith.constant 0 : i32
    return %arg0, %c0_i32 : i32, i32
  }
  func.func @transform_1(%arg0: i32, %arg1: i32) -> (i32, i32) {
    %c0_i32 = arith.constant 0 : i32
    %c0_i32_0 = arith.constant 0 : i32
    return %c0_i32, %arg1 : i32, i32
  }
  func.func @transform_2(%arg0: i32, %arg1: i32) -> (i32, i32) {
    %c0_i32 = arith.constant 0 : i32
    %c0_i32_0 = arith.constant 0 : i32
    return %c0_i32, %arg1 : i32, i32
  }
  func.func @transform_3(%arg0: i32, %arg1: i32) -> (i32, i32) {
    %c0_i32 = arith.constant 0 : i32
    return %arg0, %arg1 : i32, i32
  }
}

</mosaic_0001>

<llo_original>
// kernel: predictor_forward.1
$region0: #{predictor_forward.1}
  #allocation0 [shape = 'u32[]', space=smem, size = 0x4, offset = 0x4, fixed_abs, tag = 'smem constant byte address 0x4 - core index']
  #allocation1 [shape = 'u32[144,128]{1,0:T(1,128)}', space=vmem, size = 0x12000, scoped, tag = 'internal scratch']
  %s0 = inlined_call_operand.vmem [shape: f32[8,32], index: 0, kind: input, shape index: {}]
  %s1 = inlined_call_operand.vmem [shape: f32[32,16], index: 1, kind: input, shape index: {}]
  %s2 = inlined_call_operand.vmem [shape: f32[1,16], index: 2, kind: input, shape index: {}]
  %s3 = inlined_call_operand.hbm [shape: f32[8,16], index: 3, kind: output, shape index: {}]
  %s4 = sld [smem:[#allocation0]]
  $region22: #{predictor_forward.1} parent=0
    _
  %s6 = ssub.s32 1, %s4
  %s7 = scalar_select 0, %s6, %s4
  $region1: #{predictor_forward.1} parent=0
    #allocation2 [shape = 'u8[4096]{0}', space=vmem, size = 0x1000, scoped, tag = 'output window, operand 0, single buffered']
    #allocation3 [shape = 's32[1]{0}', space=sflag, size = 0x4, scoped, tag = 'scoped memory for predictor_forward.1']
    %8 = vsyncpa [#allocation3], 0
    // Predicated region
    $region2: #{predictor_forward.1} parent=1 // pred_check
      _
    $region3: #{predictor_forward.1} parent=1 // pred_check_branch
      %10 = sbr.rel (0) target = $region5
    $region4: #{predictor_forward.1} parent=1 // pred_region
      _
    $region5: #{predictor_forward.1} parent=1 // pred_fallthru
      _
    // Predicated region
    $region6: #{predictor_forward.1} parent=1 // pred_check
      _
    $region7: #{predictor_forward.1} parent=1 // pred_check_branch
      %12 = sbr.rel (0) target = $region9
    $region8: #{predictor_forward.1} parent=1 // pred_region
      _
    $region9: #{predictor_forward.1} parent=1 // pred_fallthru
      _
    // Predicated region
    $region10: #{predictor_forward.1} parent=1 // pred_check
      _
    $region11: #{predictor_forward.1} parent=1 // pred_check_branch
      %14 = sbr.rel (0) target = $region13
    $region12: #{predictor_forward.1} parent=1 // pred_region
      _
    $region13: #{predictor_forward.1} parent=1 // pred_fallthru
      _
    %v15 = vld [vmem:[%s0] sm:$0xff]
    %v16 = vld [vmem:[%s1] sm:$0xff]
    %v17 = vld [vmem:[%s1 + $0x8] sm:$0xff]
    %v18 = vld [vmem:[%s1 + $0x10] sm:$0xff]
    %v19 = vld [vmem:[%s1 + $0x18] sm:$0xff]
    %v20 = vld [vmem:[%s2] sm:$0x1]
    %v22 = vlaneseq
    %v23 = vshrl.u32 %v22, 7
    %v24 = vsub.s32 0, %v23
    %v25 = vrot.slane %v20, %v24
    %vm27 = vcmask 261120
    %v29 = vsel %vm27, %v15, 0
    %31 = vmatprep.subr.mxu0 0.0
    %32 = vmatpush1.msra.mxu0 0.0
    %33 = vmatprep.subr.mxu0 0.0
    %34 = vmatpush1.msra.mxu0 0.0
    %35 = vmatprep.subr.mxu0 0.0
    %36 = vmatpush1.msra.mxu0 0.0
    %37 = vmatprep.subr.mxu0 0.0
    %38 = vmatpush1.msra.mxu0 0.0
    %39 = vmatprep.subr.mxu0 0.0
    %40 = vmatpush1.msra.mxu0 0.0
    %41 = vmatprep.subr.mxu0 0.0
    %42 = vmatpush1.msra.mxu0 0.0
    %43 = vmatprep.subr.mxu0 0.0
    %44 = vmatpush1.msra.mxu0 0.0
    %45 = vmatprep.subr.mxu0 0.0
    %46 = vmatpush1.msra.mxu0 0.0
    %47 = vmatprep.subr.mxu0 0.0
    %48 = vmatpush1.msra.mxu0 0.0
    %49 = vmatprep.subr.mxu0 0.0
    %50 = vmatpush1.msra.mxu0 0.0
    %51 = vmatprep.subr.mxu0 0.0
    %52 = vmatpush1.msra.mxu0 0.0
    %53 = vmatprep.subr.mxu0 0.0
    %54 = vmatpush1.msra.mxu0 0.0
    %55 = vmatprep.subr.mxu0 0.0
    %56 = vmatpush1.msra.mxu0 %v19
    %57 = vmatprep.subr.mxu0 0.0
    %58 = vmatpush1.msra.mxu0 %v18
    %59 = vmatprep.subr.mxu0 0.0
    %60 = vmatpush1.msra.mxu0 %v17
    %61 = vmatprep.subr.mxu0 0.0
    %62 = vmatpush1.msra.mxu0 %v16
    %63 = vmatprep.subr.mxu0 0.0
    %64 = vmatpush2.msra.mxu0 0.0
    %65 = vmatprep.subr.mxu0 0.0
    %66 = vmatpush2.msra.mxu0 0.0
    %67 = vmatprep.subr.mxu0 0.0
    %68 = vmatpush2.msra.mxu0 0.0
    %69 = vmatprep.subr.mxu0 0.0
    %70 = vmatpush2.msra.mxu0 0.0
    %71 = vmatprep.subr.mxu0 0.0
    %72 = vmatpush2.msra.mxu0 0.0
    %73 = vmatprep.subr.mxu0 0.0
    %74 = vmatpush2.msra.mxu0 0.0
    %75 = vmatprep.subr.mxu0 0.0
    %76 = vmatpush2.msra.mxu0 0.0
    %77 = vmatprep.subr.mxu0 0.0
    %78 = vmatpush2.msra.mxu0 0.0
    %79 = vmatprep.subr.mxu0 0.0
    %80 = vmatpush2.msra.mxu0 0.0
    %81 = vmatprep.subr.mxu0 0.0
    %82 = vmatpush2.msra.mxu0 0.0
    %83 = vmatprep.subr.mxu0 0.0
    %84 = vmatpush2.msra.mxu0 0.0
    %85 = vmatprep.subr.mxu0 0.0
    %86 = vmatpush2.msra.mxu0 0.0
    %87 = vmatprep.subr.mxu0 0.0
    %88 = vmatpush2.msra.mxu0 0.0
    %89 = vmatprep.subr.mxu0 0.0
    %90 = vmatpush2.msra.mxu0 0.0
    %91 = vmatprep.subr.mxu0 0.0
    %92 = vmatpush2.msra.mxu0 0.0
    %93 = vmatprep.subr.mxu0 0.0
    %94 = vmatpush2.msra.mxu0 0.0
    %95 = vmatprep.mubr.f32.mxu0 0.0
    %96 = vmatmul.mubr.f32.gmra.mxu0 %v29
    %v97 = vpop.f32.mrf.mxu0
    %v98 = vadd.f32 %v25, %v97
    %v99 = vpop.f32.mrf.mxu0
    %100 = vdwg.mxu0
    %vm101 = vcmask 130048
    %102 = vst.msk [vmem:[#allocation2] sm:$0xff] %vm101, %v98
    // Predicated region
    $region14: #{predictor_forward.1} parent=1 // pred_check
      _
    $region15: #{predictor_forward.1} parent=1 // pred_check_branch
      %104 = sbr.rel (0) target = $region17
    $region16: #{predictor_forward.1} parent=1 // pred_region
      %s106 = ssub.s32 128, 128
      %107 = vsyncadd [#allocation3], %s106
      %s109 = sshll.u32 [#allocation2], 4
      %s110 = int_to_ptr.vmem [resolvable:$true] %s109
      %112 = dma.vmem_to_hbm [thread:$0]  %s110, 128, %s3, [#allocation3]
    $region17: #{predictor_forward.1} parent=1 // pred_fallthru
      _
    // Predicated region
    $region18: #{predictor_forward.1} parent=1 // pred_check
      _
    $region19: #{predictor_forward.1} parent=1 // pred_check_branch
      %114 = sbr.rel (0) target = $region21
    $region20: #{predictor_forward.1} parent=1 // pred_region
      %115 = dma.done [#allocation3], 128
    $region21: #{predictor_forward.1} parent=1 // pred_fallthru
      _
    %116 = vsyncpa [#allocation3], 1

</llo_original>
